<compile_context>
chip_gen: v7x
topology: tpu7x:2x2x1
jax: 0.10.0
libtpu: 0.0.40
codegen_flags: <defaults>
</compile_context>

<pallas_src>
import numpy as np
import jax
import jax.numpy as jnp
from jax.experimental import pallas as pl
from jax.experimental.pallas import tpu as pltpu

_P_COLS = 128          # lane-dense output width (>=128 -> unmasked stores)
_NEG_LARGE = -1e30     # column padding value: exp underflows to exactly 0


def _round_up(x, m):
    return -(-x // m) * m


def _make_kernel(inv_temperature):
    """Row-tile kernel: e = exp((f - max(f)) * 1/T); out = e @ P (MXU)."""

    def kernel(feat_ref, p_ref, out_ref):
        f = feat_ref[...]                                   # (TR, HWp) f32
        m = jnp.max(f, axis=-1, keepdims=True)              # stable softmax
        if inv_temperature == 1.0:                          # static branch
            e = jnp.exp(f - m)
        else:
            e = jnp.exp((f - m) * inv_temperature)
        # Fused weighted reductions on the MXU:
        # P columns are [pos_x, pos_y, ones, 0...]; padded HW rows are 0.
        out_ref[...] = jnp.dot(e, p_ref[...],
                               preferred_element_type=jnp.float32)

    return kernel


class ExtendedSpatialSoftmaxPallas:
    def __init__(self, height, width, channel, temperature=None,
                 camera_intrinsic=(450, 0, 320, 0, 450, 240, 0, 0, 1),
                 data_format="NCHW"):
        self.data_format = data_format
        self.height = height
        self.width = width
        self.channel = channel
        # temperature=None -> plain float 1.0 (same as the PyTorch module).
        # TODO(synk): trainable temperature Parameter path not implemented.
        self.temperature = float(temperature) if temperature else 1.0

        hw = height * width
        self.hw = hw
        self.hw_pad = _round_up(hw, 128)

        # Deterministic buffers, identical construction to the torch module.
        pos_x, pos_y = np.meshgrid(np.linspace(-1.0, 1.0, height),
                                   np.linspace(-1.0, 1.0, width))
        pos_x = pos_x.reshape(hw).astype(np.float32)
        pos_y = pos_y.reshape(hw).astype(np.float32)
        self.pos_x = jnp.asarray(pos_x)[None, :]
        self.pos_y = jnp.asarray(pos_y)[None, :]

        # Projection matrix for the fused MXU reduction.
        proj = np.zeros((self.hw_pad, _P_COLS), dtype=np.float32)
        proj[:hw, 0] = pos_x
        proj[:hw, 1] = pos_y
        proj[:hw, 2] = 1.0
        self.proj = jnp.asarray(proj)

        ci = np.asarray(camera_intrinsic, dtype=np.float32)
        self.cx, self.cy = float(ci[2]), float(ci[5])
        self.fx, self.fy = float(ci[0]), float(ci[4])

    # ------------------------------------------------------------------ #
    def _spatial_moments(self, feat2d):
        """(R, HW) -> (R, 3): per-row [sum(pos_x*e), sum(pos_y*e), sum(e)]."""
        n_rows = feat2d.shape[0]
        hw, hw_pad = self.hw, self.hw_pad

        # Row tile: multiple of 8, roughly <=4 MiB per (TR, HWpad) f32 buffer.
        per_row_bytes = hw_pad * 4
        tr = max(8, min(512, (4 * 1024 * 1024) // per_row_bytes))
        tr = max(8, (tr // 8) * 8)
        tr = min(tr, _round_up(n_rows, 8))
        rows_pad = _round_up(n_rows, tr)
        # TODO(synk): for very large HW (tile would not fit VMEM) an
        # "arbitrary" HW grid axis with an online-softmax accumulator is
        # needed; not required for these configurations.

        # Pad: extra HW columns with -1e30 (exp -> 0), extra rows with zeros.
        f = feat2d
        if hw_pad > hw:
            f = jnp.pad(f, ((0, 0), (0, hw_pad - hw)),
                        constant_values=_NEG_LARGE)
        if rows_pad > n_rows:
            f = jnp.pad(f, ((0, rows_pad - n_rows), (0, 0)))

        grid = (rows_pad // tr,)

        # Explicit VMEM budget: double-buffered feat tile + P + output tile.
        vmem_bytes = 2 * (tr * hw_pad + hw_pad * _P_COLS + tr * _P_COLS) * 4
        vmem_limit = int(min(max(2 * vmem_bytes + (4 << 20), 32 << 20),
                             96 << 20))

        kernel = _make_kernel(1.0 / self.temperature)
        out = pl.pallas_call(
            kernel,
            grid=grid,
            in_specs=[
                pl.BlockSpec((tr, hw_pad), lambda i: (i, 0)),
                pl.BlockSpec((hw_pad, _P_COLS), lambda i: (0, 0)),
            ],
            out_specs=pl.BlockSpec((tr, _P_COLS), lambda i: (i, 0)),
            out_shape=jax.ShapeDtypeStruct((rows_pad, _P_COLS), jnp.float32),
            compiler_params=pltpu.CompilerParams(
                dimension_semantics=("parallel",),
                vmem_limit_bytes=vmem_limit,
            ),
        )(f, self.proj)

        return out[:n_rows, :3]

    # ------------------------------------------------------------------ #
    def __call__(self, feature, depth):
        batch_size = feature.shape[0]
        hw = self.hw

        if self.data_format == "NHWC":
            feature = jnp.transpose(feature, (0, 3, 1, 2))
        feat2d = feature.reshape(-1, hw).astype(jnp.float32)    # (B*C, HW)

        moments = self._spatial_moments(feat2d)                 # (B*C, 3)
        inv_denom = 1.0 / moments[:, 2:3]
        expected_x = moments[:, 0:1] * inv_denom                # (B*C, 1)
        expected_y = moments[:, 1:2] * inv_denom                # (B*C, 1)

        # --- post-processing (matches the PyTorch forward exactly) ---
        image_height = depth.shape[3]
        image_width = depth.shape[2]
        flat_depth = depth.reshape(-1)          # torch.take flattens anyway

        coord = (expected_x * self.cx - 1 + self.cx
                 + (expected_y * self.cy + self.cy - 1) * image_width)
        coord = jnp.round(coord).astype(jnp.int32)              # (B*C, 1)

        # TODO(synk): torch.take raises on OOB indices; jnp.take clips instead
        # (data-dependent flat gather kept in plain JAX, outside the kernel).
        Z = jnp.take(flat_depth, coord, mode="clip")            # (B*C, 1)
        X = Z / self.fx * image_width / 2 * expected_x
        Y = Z / self.fy * image_height / 2 * expected_y

        xyz = jnp.stack([X, Y, Z], axis=1).reshape(
            (batch_size, 3, 1, self.channel))
        return xyz


if __name__ == "__main__":
    B, C, H, W = 2, 4, 16, 16

    key = jax.random.PRNGKey(0)
    k_feat, k_depth = jax.random.split(key)
    feature = jax.random.normal(k_feat, (B, C, H, W), dtype=jnp.float32)
    # positive depths in [0.5, 1.5)
    depth = jax.random.uniform(k_depth, (B, 1, W, H), dtype=jnp.float32) + 0.5

    # Intrinsics scaled so the (round -> take) coordinate stays in range for a
    # 16x16 depth map (original defaults assume a 640x480 image).
    module = ExtendedSpatialSoftmaxPallas(
        height=H, width=W, channel=C,
        camera_intrinsic=[8, 0, 8, 0, 8, 8, 0, 0, 1],
        data_format="NCHW",
    )

    xyz = module(feature, depth)
    jax.block_until_ready(xyz)

    # Reference check for the kernel part (expected coordinates) in plain JAX.
    feat2d = feature.reshape(-1, H * W)
    attn = jax.nn.softmax(feat2d, axis=-1)
    ref_ex = jnp.sum(module.pos_x * attn, axis=-1, keepdims=True)
    ref_ey = jnp.sum(module.pos_y * attn, axis=-1, keepdims=True)
    m = module._spatial_moments(feat2d)
    got_ex = m[:, 0:1] / m[:, 2:3]
    got_ey = m[:, 1:2] / m[:, 2:3]
    assert bool(jnp.max(jnp.abs(got_ex - ref_ex)) < 1e-3)
    assert bool(jnp.max(jnp.abs(got_ey - ref_ey)) < 1e-3)

    assert xyz.shape == (B, 3, 1, C), xyz.shape
    assert xyz.dtype == jnp.float32
    assert bool(jnp.all(jnp.isfinite(xyz)))
    print("KERNEL_OK")
</pallas_src>

<mosaic_0001>
module attributes {stable_mosaic.version = 11 : i64} {
  func.func @kernel(%arg0: i32, %arg1: memref<8x256xf32, #tpu.memory_space<vmem>>, %arg2: memref<256x128xf32, #tpu.memory_space<vmem>>, %arg3: memref<8x128xf32, #tpu.memory_space<vmem>>) attributes {dimension_semantics = [#tpu.dimension_semantics<parallel>], iteration_bounds = array<i64: 1>, scalar_prefetch = 0 : i64, scratch_operands = 0 : i64, tpu.core_type = #tpu.core_type<tc>, window_params = [{transform_indices = @transform_0, window_bounds = array<i64: 8, 256>}, {pipeline_mode = #tpu.pipeline_mode<synchronous>, transform_indices = @transform_1, window_bounds = array<i64: 256, 128>}, {transform_indices = @transform_2, window_bounds = array<i64: 8, 128>}]} {
    %c0 = arith.constant 0 : index
    %c0_0 = arith.constant 0 : index
    %0 = vector.load %arg1[%c0, %c0_0] : memref<8x256xf32, #tpu.memory_space<vmem>>, vector<8x256xf32>
    %cst = arith.constant dense<0xFF800000> : vector<8xf32>
    %1 = vector.multi_reduction <maximumf>, %0, %cst [1] : vector<8x256xf32> to vector<8xf32>
    %2 = vector.shape_cast %1 : vector<8xf32> to vector<8x1xf32>
    %3 = vector.broadcast %2 : vector<8x1xf32> to vector<8x256xf32>
    %4 = arith.subf %0, %3 : vector<8x256xf32>
    %5 = math.exp %4 : vector<8x256xf32>
    %c0_1 = arith.constant 0 : index
    %c0_2 = arith.constant 0 : index
    %6 = vector.load %arg2[%c0_1, %c0_2] : memref<256x128xf32, #tpu.memory_space<vmem>>, vector<256x128xf32>
    %cst_3 = arith.constant dense<0.000000e+00> : vector<8x128xf32>
    %7 = tpu.matmul %5, %6, %cst_3 {dimension_numbers = #tpu.dot_dimension_numbers<[1], [0], [0], [1], [0, 0, 1, 1], [], []>} : vector<8x256xf32>, vector<256x128xf32>, vector<8x128xf32> -> vector<8x128xf32>
    %c0_4 = arith.constant 0 : index
    %c0_5 = arith.constant 0 : index
    %8 = vector.load %arg3[%c0_4, %c0_5] : memref<8x128xf32, #tpu.memory_space<vmem>>, vector<8x128xf32>
    tpu.vector_store %arg3[%c0_4, %c0_5], %7 {strides = array<i32>} : memref<8x128xf32, #tpu.memory_space<vmem>>, vector<8x128xf32>,
    return
  }
  func.func @transform_0(%arg0: i32) -> (i32, i32) {
    %c0_i32 = arith.constant 0 : i32
    %c0_i32_0 = arith.constant 0 : i32
    return %arg0, %c0_i32 : i32, i32
  }
  func.func @transform_1(%arg0: i32) -> (i32, i32) {
    %c0_i32 = arith.constant 0 : i32
    %c0_i32_0 = arith.constant 0 : i32
    %c0_i32_1 = arith.constant 0 : i32
    return %c0_i32, %c0_i32_0 : i32, i32
  }
  func.func @transform_2(%arg0: i32) -> (i32, i32) {
    %c0_i32 = arith.constant 0 : i32
    %c0_i32_0 = arith.constant 0 : i32
    return %arg0, %c0_i32 : i32, i32
  }
}

</mosaic_0001>

<llo_original>
// kernel: tpu_custom_call.1
$region0: #{tpu_custom_call.1}
  #allocation0 [shape = 'u32[]', space=smem, size = 0x4, offset = 0x4, fixed_abs, tag = 'smem constant byte address 0x4 - core index']
  #allocation1 [shape = 'u32[144,128]{1,0:T(1,128)}', space=vmem, size = 0x12000, scoped, tag = 'internal scratch']
  %s0 = inlined_call_operand.hbm [shape: f32[8,256], index: 0, kind: input, shape index: {}]
  %s1 = inlined_call_operand.hbm [shape: f32[256,128], index: 1, kind: input, shape index: {}]
  %s2 = inlined_call_operand.hbm [shape: f32[8,128], index: 2, kind: output, shape index: {}]
  %s3 = sld [smem:[#allocation0]]
  $region26: #{tpu_custom_call.1} parent=0
    _
  %s5 = ssub.s32 1, %s3
  %s6 = scalar_select 0, %s5, %s3
  $region1: #{tpu_custom_call.1} parent=0
    #allocation2 [shape = 'u8[8192]{0}', space=vmem, size = 0x2000, scoped, tag = 'input window, operand 0, single buffered']
    #allocation3 [shape = 's32[1]{0}', space=sflag, size = 0x4, scoped, tag = 'scoped memory for tpu_custom_call.1']
    #allocation4 [shape = 's32[1]{0}', space=sflag, size = 0x4, scoped, tag = 'scoped memory for tpu_custom_call.1']
    #allocation5 [shape = 'u8[131072]{0}', space=vmem, size = 0x20000, scoped, tag = 'input window, operand 1, single buffered']
    #allocation6 [shape = 's32[1]{0}', space=sflag, size = 0x4, scoped, tag = 'scoped memory for tpu_custom_call.1']
    #allocation7 [shape = 'u8[4096]{0}', space=vmem, size = 0x1000, scoped, tag = 'output window, operand 0, single buffered']
    %7 = vsyncpa [#allocation3], 0
    %8 = vsyncpa [#allocation6], 0
    %9 = vsyncpa [#allocation4], 0
    // Predicated region
    $region2: #{tpu_custom_call.1} parent=1 // pred_check
      _
    $region3: #{tpu_custom_call.1} parent=1 // pred_check_branch
      %11 = sbr.rel (0) target = $region5
    $region4: #{tpu_custom_call.1} parent=1 // pred_region
      %s13 = ssub.s32 256, 256
      %14 = vsyncadd [#allocation3], %s13
      %s16 = sshll.u32 [#allocation2], 4
      %s17 = int_to_ptr.vmem [resolvable:$true] %s16
      %19 = dma.hbm_to_vmem [thread:$0]  %s0, 256, %s17, [#allocation3]
    $region5: #{tpu_custom_call.1} parent=1 // pred_fallthru
      _
    // Predicated region
    $region6: #{tpu_custom_call.1} parent=1 // pred_check
      _
    $region7: #{tpu_custom_call.1} parent=1 // pred_check_branch
      %21 = sbr.rel (0) target = $region9
    $region8: #{tpu_custom_call.1} parent=1 // pred_region
      %s23 = ssub.s32 4096, 4096
      %24 = vsyncadd [#allocation6], %s23
      %s25 = sshll.u32 [#allocation5], 4
      %s26 = int_to_ptr.vmem [resolvable:$true] %s25
      %31 = dma.hbm_to_vmem [thread:$0]  %s1, 4096, %s26, [#allocation6], 128, 128, 8
    $region9: #{tpu_custom_call.1} parent=1 // pred_fallthru
      _
    // Predicated region
    $region10: #{tpu_custom_call.1} parent=1 // pred_check
      _
    $region11: #{tpu_custom_call.1} parent=1 // pred_check_branch
      %33 = sbr.rel (0) target = $region13
    $region12: #{tpu_custom_call.1} parent=1 // pred_region
      %34 = dma.done [#allocation3], 256
    $region13: #{tpu_custom_call.1} parent=1 // pred_fallthru
      _
    // Predicated region
    $region14: #{tpu_custom_call.1} parent=1 // pred_check
      _
    $region15: #{tpu_custom_call.1} parent=1 // pred_check_branch
      %36 = sbr.rel (0) target = $region17
    $region16: #{tpu_custom_call.1} parent=1 // pred_region
      %37 = dma.done [#allocation6], 4096
    $region17: #{tpu_custom_call.1} parent=1 // pred_fallthru
      _
    %v38 = vld [vmem:[#allocation2] sm:$0xff]
    %v39 = vld [vmem:[#allocation2 + $0x8] sm:$0xff]
    %v40 = vmax.f32 %v38, %v39
    %41 = vmax.xlane.f32.xlu0 %v40
    %v42 = vpop.xlane.xlu0 %41
    %v43 = vsub.f32 %v38, %v42
    %v44 = vsub.f32 %v39, %v42
    %v45 = vmul.f32 %v43, 1.442695
    %v46 = vpow.pop %v45
    %v47 = vmul.f32 %v44, 1.442695
    %v48 = vpow.pop %v47
    %v49 = vld [vmem:[#allocation5] sm:$0xff]
    %v50 = vld [vmem:[#allocation5 + $0x8] sm:$0xff]
    %v51 = vld [vmem:[#allocation5 + $0x10] sm:$0xff]
    %v52 = vld [vmem:[#allocation5 + $0x18] sm:$0xff]
    %v53 = vld [vmem:[#allocation5 + $0x20] sm:$0xff]
    %v54 = vld [vmem:[#allocation5 + $0x28] sm:$0xff]
    %v55 = vld [vmem:[#allocation5 + $0x30] sm:$0xff]
    %v56 = vld [vmem:[#allocation5 + $0x38] sm:$0xff]
    %v57 = vld [vmem:[#allocation5 + $0x40] sm:$0xff]
    %v58 = vld [vmem:[#allocation5 + $0x48] sm:$0xff]
    %v59 = vld [vmem:[#allocation5 + $0x50] sm:$0xff]
    %v60 = vld [vmem:[#allocation5 + $0x58] sm:$0xff]
    %v61 = vld [vmem:[#allocation5 + $0x60] sm:$0xff]
    %v62 = vld [vmem:[#allocation5 + $0x68] sm:$0xff]
    %v63 = vld [vmem:[#allocation5 + $0x70] sm:$0xff]
    %v64 = vld [vmem:[#allocation5 + $0x78] sm:$0xff]
    %v65 = vld [vmem:[#allocation5 + $0x80] sm:$0xff]
    %v66 = vld [vmem:[#allocation5 + $0x88] sm:$0xff]
    %v67 = vld [vmem:[#allocation5 + $0x90] sm:$0xff]
    %v68 = vld [vmem:[#allocation5 + $0x98] sm:$0xff]
    %v69 = vld [vmem:[#allocation5 + $0xa0] sm:$0xff]
    %v70 = vld [vmem:[#allocation5 + $0xa8] sm:$0xff]
    %v71 = vld [vmem:[#allocation5 + $0xb0] sm:$0xff]
    %v72 = vld [vmem:[#allocation5 + $0xb8] sm:$0xff]
    %v73 = vld [vmem:[#allocation5 + $0xc0] sm:$0xff]
    %v74 = vld [vmem:[#allocation5 + $0xc8] sm:$0xff]
    %v75 = vld [vmem:[#allocation5 + $0xd0] sm:$0xff]
    %v76 = vld [vmem:[#allocation5 + $0xd8] sm:$0xff]
    %v77 = vld [vmem:[#allocation5 + $0xe0] sm:$0xff]
    %v78 = vld [vmem:[#allocation5 + $0xe8] sm:$0xff]
    %v79 = vld [vmem:[#allocation5 + $0xf0] sm:$0xff]
    %v80 = vld [vmem:[#allocation5 + $0xf8] sm:$0xff]
    %81 = vmatprep.subr.mxu0 0.0
    %82 = vmatpush1.msra.mxu0 %v49
    %83 = vmatprep.subr.mxu0 0.0
    %84 = vmatpush1.msra.mxu0 %v50
    %85 = vmatprep.subr.mxu0 0.0
    %86 = vmatpush1.msra.mxu0 %v51
    %87 = vmatprep.subr.mxu0 0.0
    %88 = vmatpush1.msra.mxu0 %v52
    %89 = vmatprep.subr.mxu0 0.0
    %90 = vmatpush1.msra.mxu0 %v53
    %91 = vmatprep.subr.mxu0 0.0
    %92 = vmatpush1.msra.mxu0 %v54
    %93 = vmatprep.subr.mxu0 0.0
    %94 = vmatpush1.msra.mxu0 %v55
    %95 = vmatprep.subr.mxu0 0.0
    %96 = vmatpush1.msra.mxu0 %v56
    %97 = vmatprep.subr.mxu0 0.0
    %98 = vmatpush1.msra.mxu0 %v57
    %99 = vmatprep.subr.mxu0 0.0
    %100 = vmatpush1.msra.mxu0 %v58
    %101 = vmatprep.subr.mxu0 0.0
    %102 = vmatpush1.msra.mxu0 %v59
    %103 = vmatprep.subr.mxu0 0.0
    %104 = vmatpush1.msra.mxu0 %v60
    %105 = vmatprep.subr.mxu0 0.0
    %106 = vmatpush1.msra.mxu0 %v61
    %107 = vmatprep.subr.mxu0 0.0
    %108 = vmatpush1.msra.mxu0 %v62
    %109 = vmatprep.subr.mxu0 0.0
    %110 = vmatpush1.msra.mxu0 %v63
    %111 = vmatprep.subr.mxu0 0.0
    %112 = vmatpush1.msra.mxu0 %v64
    %113 = vmatprep.subr.mxu0 0.0
    %114 = vmatpush1.msra.mxu0 %v65
    %115 = vmatprep.subr.mxu0 0.0
    %116 = vmatpush1.msra.mxu0 %v66
    %117 = vmatprep.subr.mxu0 0.0
    %118 = vmatpush1.msra.mxu0 %v67
    %119 = vmatprep.subr.mxu0 0.0
    %120 = vmatpush1.msra.mxu0 %v68
    %121 = vmatprep.subr.mxu0 0.0
    %122 = vmatpush1.msra.mxu0 %v69
    %123 = vmatprep.subr.mxu0 0.0
    %124 = vmatpush1.msra.mxu0 %v70
    %125 = vmatprep.subr.mxu0 0.0
    %126 = vmatpush1.msra.mxu0 %v71
    %127 = vmatprep.subr.mxu0 0.0
    %128 = vmatpush1.msra.mxu0 %v72
    %129 = vmatprep.subr.mxu0 0.0
    %130 = vmatpush1.msra.mxu0 %v73
    %131 = vmatprep.subr.mxu0 0.0
    %132 = vmatpush1.msra.mxu0 %v74
    %133 = vmatprep.subr.mxu0 0.0
    %134 = vmatpush1.msra.mxu0 %v75
    %135 = vmatprep.subr.mxu0 0.0
    %136 = vmatpush1.msra.mxu0 %v76
    %137 = vmatprep.subr.mxu0 0.0
    %138 = vmatpush1.msra.mxu0 %v77
    %139 = vmatprep.subr.mxu0 0.0
    %140 = vmatpush1.msra.mxu0 %v78
    %141 = vmatprep.subr.mxu0 0.0
    %142 = vmatpush1.msra.mxu0 %v79
    %143 = vmatprep.subr.mxu0 0.0
    %144 = vmatpush1.msra.mxu0 %v80
    %145 = vmatprep.mubr.f32.mxu0 %v48
    %146 = vmatmul.mubr.f32.gmra.mrb[0].mxu0 %v46
    %v147 = vpop.f32.mrb[0].mxu0
    %v148 = vadd.f32 0.0, %v147
    %v149 = vpop.f32.mrb[0].mxu0
    %150 = vdwg.mxu0
    %151 = vst [vmem:[#allocation7] sm:$0xff] %v148
    // Predicated region
    $region18: #{tpu_custom_call.1} parent=1 // pred_check
      _
    $region19: #{tpu_custom_call.1} parent=1 // pred_check_branch
      %153 = sbr.rel (0) target = $region21
    $region20: #{tpu_custom_call.1} parent=1 // pred_region
      %s155 = ssub.s32 128, 128
      %156 = vsyncadd [#allocation4], %s155
      %s158 = sshll.u32 [#allocation7], 4
      %s159 = int_to_ptr.vmem [resolvable:$true] %s158
      %161 = dma.vmem_to_hbm [thread:$0]  %s159, 128, %s2, [#allocation4]
    $region21: #{tpu_custom_call.1} parent=1 // pred_fallthru
      _
    // Predicated region
    $region22: #{tpu_custom_call.1} parent=1 // pred_check
      _
    $region23: #{tpu_custom_call.1} parent=1 // pred_check_branch
      %163 = sbr.rel (0) target = $region25
    $region24: #{tpu_custom_call.1} parent=1 // pred_region
      %164 = dma.done [#allocation4], 128
    $region25: #{tpu_custom_call.1} parent=1 // pred_fallthru
      _
    %165 = vsyncpa [#allocation3], 1
    %166 = vsyncpa [#allocation6], 1
    %167 = vsyncpa [#allocation4], 1

</llo_original>
